<compile_context>
chip_gen: v6e
topology: v6e:2x2x1
jax: 0.10.0
libtpu: 0.0.40
codegen_flags: <defaults>
</compile_context>

<pallas_src>
import jax
import jax.numpy as jnp
from jax.experimental import pallas as pl
from jax.experimental.pallas import tpu as pltpu


def bvnorm_proj_kernel(f_ref, basis_ref, o_ref):
    # f: (B, M)  ×  basis tile: (M, tile_x)  ->  (B, tile_x)
    o_ref[...] = jnp.dot(
        f_ref[...], basis_ref[...], preferred_element_type=jnp.float32
    ).astype(o_ref.dtype)


def _round_up(v, m):
    return ((v + m - 1) // m) * m


def bvnorm_forward(x_func, basis, w1, b1, w2, b2, *, tile_x=512):
    """Pallas implementation of BVNORM.forward((x_func, x_loc)) with geo=None."""
    squeeze = False
    if x_func.ndim == 1:                 # einsum('m,xm->x') path
        x_func = x_func[None, :]
        squeeze = True

    B, _ = x_func.shape
    X, M = basis.shape

    # --- BC_NET (hoisted out of the kernel: ~1 KFLOP, pure XLA) -------------
    h = jnp.tanh(x_func.astype(jnp.float32) @ w1 + b1)
    f = (h @ w2 + b2).astype(jnp.float32)            # (B, M)

    # --- lane-dense basis layout: (M, X), padded to a multiple of tile_x ----
    tile = min(tile_x, _round_up(X, 128))            # don't over-tile tiny X
    x_pad = _round_up(X, tile)
    basis_t = basis.T.astype(jnp.float32)            # (M, X), one-time XLA transpose
    if x_pad != X:
        basis_t = jnp.pad(basis_t, ((0, 0), (0, x_pad - X)))

    out = pl.pallas_call(
        bvnorm_proj_kernel,
        out_shape=jax.ShapeDtypeStruct((B, x_pad), jnp.float32),
        grid_spec=pltpu.PrefetchScalarGridSpec(
            num_scalar_prefetch=0,
            grid=(x_pad // tile,),
            in_specs=[
                pl.BlockSpec((B, M), lambda i: (0, 0)),      # f      (resident)
                pl.BlockSpec((M, tile), lambda i: (0, i)),   # basis  X-tile (lane-dense)
            ],
            out_specs=pl.BlockSpec((B, tile), lambda i: (0, i)),
        ),
        compiler_params=pltpu.CompilerParams(
            dimension_semantics=("parallel",),
        ),
    )(f, basis_t)

    out = out[:, :X]
    return out[0] if squeeze else out


def reference_forward(x_func, basis, w1, b1, w2, b2):
    squeeze = x_func.ndim == 1
    xf = x_func[None, :] if squeeze else x_func
    h = jnp.tanh(xf @ w1 + b1)
    f = h @ w2 + b2
    out = jnp.einsum('bm,xm->bx', f, basis)
    return out[0] if squeeze else out


if __name__ == "__main__":
    # Small shapes consistent with the module: batch of boundary-condition
    # samples, BC_NET: D_in -> H -> modes, basis: (X, modes).
    B, D_in, H, M, X = 2, 8, 32, 16, 256

    key = jax.random.PRNGKey(0)
    k_x, k_basis, k_w1, k_b1, k_w2, k_b2 = jax.random.split(key, 6)

    x_func = jax.random.normal(k_x, (B, D_in), dtype=jnp.float32)
    x_loc = jnp.zeros((X, 3), dtype=jnp.float32)   # unused (geo=None branch)
    basis = jax.random.normal(k_basis, (X, M), dtype=jnp.float32)

    # Deterministic BC_NET parameters.
    w1 = jax.random.normal(k_w1, (D_in, H), dtype=jnp.float32) * 0.1
    b1 = jax.random.normal(k_b1, (1, H), dtype=jnp.float32) * 0.1
    w2 = jax.random.normal(k_w2, (H, M), dtype=jnp.float32) * 0.1
    b2 = jax.random.normal(k_b2, (1, M), dtype=jnp.float32) * 0.1

    # Batched path: einsum('bm,xm->bx')
    out = bvnorm_forward(x_func, basis, w1, b1, w2, b2)
    out = jax.block_until_ready(out)
    ref = reference_forward(x_func, basis, w1, b1, w2, b2)
    assert out.shape == (B, X), out.shape
    assert jnp.allclose(out, ref, atol=1e-4, rtol=1e-4), "batched mismatch vs reference"

    # Unbatched path: einsum('m,xm->x')
    out1 = bvnorm_forward(x_func[0], basis, w1, b1, w2, b2)
    out1 = jax.block_until_ready(out1)
    ref1 = reference_forward(x_func[0], basis, w1, b1, w2, b2)
    assert out1.shape == (X,), out1.shape
    assert jnp.allclose(out1, ref1, atol=1e-4, rtol=1e-4), "unbatched mismatch vs reference"

    print("KERNEL_OK")
</pallas_src>

<mosaic_0001>
module attributes {stable_mosaic.version = 11 : i64} {
  func.func @bvnorm_proj_kernel(%arg0: i32, %arg1: memref<2x16xf32, #tpu.memory_space<vmem>>, %arg2: memref<16x256xf32, #tpu.memory_space<vmem>>, %arg3: memref<2x256xf32, #tpu.memory_space<vmem>>) attributes {dimension_semantics = [#tpu.dimension_semantics<parallel>], iteration_bounds = array<i64: 1>, scalar_prefetch = 0 : i64, scratch_operands = 0 : i64, tpu.core_type = #tpu.core_type<tc>, window_params = [{pipeline_mode = #tpu.pipeline_mode<synchronous>, transform_indices = @transform_0, window_bounds = array<i64: 2, 16>}, {transform_indices = @transform_1, window_bounds = array<i64: 16, 256>}, {transform_indices = @transform_2, window_bounds = array<i64: 2, 256>}]} {
    %c0 = arith.constant 0 : index
    %c0_0 = arith.constant 0 : index
    %0 = vector.load %arg1[%c0, %c0_0] : memref<2x16xf32, #tpu.memory_space<vmem>>, vector<2x16xf32>
    %c0_1 = arith.constant 0 : index
    %c0_2 = arith.constant 0 : index
    %1 = vector.load %arg2[%c0_1, %c0_2] : memref<16x256xf32, #tpu.memory_space<vmem>>, vector<16x256xf32>
    %cst = arith.constant dense<0.000000e+00> : vector<2x256xf32>
    %2 = tpu.matmul %0, %1, %cst {dimension_numbers = #tpu.dot_dimension_numbers<[1], [0], [0], [1], [0, 0, 1, 1], [], []>} : vector<2x16xf32>, vector<16x256xf32>, vector<2x256xf32> -> vector<2x256xf32>
    %c0_3 = arith.constant 0 : index
    %c0_4 = arith.constant 0 : index
    %3 = vector.load %arg3[%c0_3, %c0_4] : memref<2x256xf32, #tpu.memory_space<vmem>>, vector<2x256xf32>
    tpu.vector_store %arg3[%c0_3, %c0_4], %2 {strides = array<i32>} : memref<2x256xf32, #tpu.memory_space<vmem>>, vector<2x256xf32>,
    return
  }
  func.func @transform_0(%arg0: i32) -> (i32, i32) {
    %c0_i32 = arith.constant 0 : i32
    %c0_i32_0 = arith.constant 0 : i32
    %c0_i32_1 = arith.constant 0 : i32
    return %c0_i32, %c0_i32_0 : i32, i32
  }
  func.func @transform_1(%arg0: i32) -> (i32, i32) {
    %c0_i32 = arith.constant 0 : i32
    %c0_i32_0 = arith.constant 0 : i32
    return %c0_i32, %arg0 : i32, i32
  }
  func.func @transform_2(%arg0: i32) -> (i32, i32) {
    %c0_i32 = arith.constant 0 : i32
    %c0_i32_0 = arith.constant 0 : i32
    return %c0_i32, %arg0 : i32, i32
  }
}

</mosaic_0001>

<llo_original>
// kernel: tpu_custom_call.1
$region0: #{tpu_custom_call.1}
  #allocation0 [shape = 'u32[]', space=smem, size = 0x4, offset = 0x4, fixed_abs, tag = 'smem constant byte address 0x4 - core index']
  #allocation1 [shape = 'u32[144,128]{1,0:T(1,128)}', space=vmem, size = 0x12000, scoped, tag = 'internal scratch']
  %s0 = inlined_call_operand.hbm [shape: f32[2,16], index: 0, kind: input, shape index: {}]
  %s1 = inlined_call_operand.hbm [shape: f32[16,256], index: 1, kind: input, shape index: {}]
  %s2 = inlined_call_operand.hbm [shape: f32[2,256], index: 2, kind: output, shape index: {}]
  %s3 = sld [smem:[#allocation0]]
  $region26: #{tpu_custom_call.1} parent=0
    _
  %s5 = ssub.s32 1, %s3
  %s6 = scalar_select 0, %s5, %s3
  $region1: #{tpu_custom_call.1} parent=0
    #allocation2 [shape = 'u8[1024]{0}', space=vmem, size = 0x400, scoped, tag = 'input window, operand 0, single buffered']
    #allocation3 [shape = 's32[1]{0}', space=sflag, size = 0x4, scoped, tag = 'scoped memory for tpu_custom_call.1']
    #allocation4 [shape = 's32[1]{0}', space=sflag, size = 0x4, scoped, tag = 'scoped memory for tpu_custom_call.1']
    #allocation5 [shape = 'u8[16384]{0}', space=vmem, size = 0x4000, scoped, tag = 'input window, operand 1, single buffered']
    #allocation6 [shape = 's32[1]{0}', space=sflag, size = 0x4, scoped, tag = 'scoped memory for tpu_custom_call.1']
    #allocation7 [shape = 'u8[2048]{0}', space=vmem, size = 0x800, scoped, tag = 'output window, operand 0, single buffered']
    %7 = vsyncpa [#allocation3], 0
    %8 = vsyncpa [#allocation6], 0
    %9 = vsyncpa [#allocation4], 0
    // Predicated region
    $region2: #{tpu_custom_call.1} parent=1 // pred_check
      _
    $region3: #{tpu_custom_call.1} parent=1 // pred_check_branch
      %11 = sbr.rel (0) target = $region5
    $region4: #{tpu_custom_call.1} parent=1 // pred_region
      %s13 = ssub.s32 32, 32
      %14 = vsyncadd [#allocation3], %s13
      %s16 = sshll.u32 [#allocation2], 4
      %s17 = int_to_ptr.vmem [resolvable:$true] %s16
      %19 = dma.hbm_to_vmem [thread:$0]  %s0, 32, %s17, [#allocation3]
    $region5: #{tpu_custom_call.1} parent=1 // pred_fallthru
      _
    // Predicated region
    $region6: #{tpu_custom_call.1} parent=1 // pred_check
      _
    $region7: #{tpu_custom_call.1} parent=1 // pred_check_branch
      %21 = sbr.rel (0) target = $region9
    $region8: #{tpu_custom_call.1} parent=1 // pred_region
      %s23 = ssub.s32 512, 512
      %24 = vsyncadd [#allocation6], %s23
      %s25 = sshll.u32 [#allocation5], 4
      %s26 = int_to_ptr.vmem [resolvable:$true] %s25
      %31 = dma.hbm_to_vmem [thread:$0]  %s1, 512, %s26, [#allocation6], 256, 256, 16
    $region9: #{tpu_custom_call.1} parent=1 // pred_fallthru
      _
    // Predicated region
    $region10: #{tpu_custom_call.1} parent=1 // pred_check
      _
    $region11: #{tpu_custom_call.1} parent=1 // pred_check_branch
      %33 = sbr.rel (0) target = $region13
    $region12: #{tpu_custom_call.1} parent=1 // pred_region
      %34 = dma.done [#allocation3], 32
    $region13: #{tpu_custom_call.1} parent=1 // pred_fallthru
      _
    // Predicated region
    $region14: #{tpu_custom_call.1} parent=1 // pred_check
      _
    $region15: #{tpu_custom_call.1} parent=1 // pred_check_branch
      %36 = sbr.rel (0) target = $region17
    $region16: #{tpu_custom_call.1} parent=1 // pred_region
      %37 = dma.done [#allocation6], 512
    $region17: #{tpu_custom_call.1} parent=1 // pred_fallthru
      _
    %v38 = vld [vmem:[#allocation2] sm:$0x3]
    %v39 = vld [vmem:[#allocation5] sm:$0xff]
    %v40 = vld [vmem:[#allocation5 + $0x8] sm:$0xff]
    %v41 = vld [vmem:[#allocation5 + $0x10] sm:$0xff]
    %v42 = vld [vmem:[#allocation5 + $0x18] sm:$0xff]
    %vm43 = vcmask 130048
    %v45 = vsel %vm43, %v38, 0
    %47 = vmatprep.subr.mxu0 0.0
    %48 = vmatpush1.msra.mxu0 0.0
    %49 = vmatprep.subr.mxu0 0.0
    %50 = vmatpush1.msra.mxu0 0.0
    %51 = vmatprep.subr.mxu0 0.0
    %52 = vmatpush1.msra.mxu0 0.0
    %53 = vmatprep.subr.mxu0 0.0
    %54 = vmatpush1.msra.mxu0 0.0
    %55 = vmatprep.subr.mxu0 0.0
    %56 = vmatpush1.msra.mxu0 0.0
    %57 = vmatprep.subr.mxu0 0.0
    %58 = vmatpush1.msra.mxu0 0.0
    %59 = vmatprep.subr.mxu0 0.0
    %60 = vmatpush1.msra.mxu0 0.0
    %61 = vmatprep.subr.mxu0 0.0
    %62 = vmatpush1.msra.mxu0 0.0
    %63 = vmatprep.subr.mxu0 0.0
    %64 = vmatpush1.msra.mxu0 0.0
    %65 = vmatprep.subr.mxu0 0.0
    %66 = vmatpush1.msra.mxu0 0.0
    %67 = vmatprep.subr.mxu0 0.0
    %68 = vmatpush1.msra.mxu0 0.0
    %69 = vmatprep.subr.mxu0 0.0
    %70 = vmatpush1.msra.mxu0 0.0
    %71 = vmatprep.subr.mxu0 0.0
    %72 = vmatpush1.msra.mxu0 0.0
    %73 = vmatprep.subr.mxu0 0.0
    %74 = vmatpush1.msra.mxu0 0.0
    %75 = vmatprep.subr.mxu0 %v42
    %76 = vmatpush1.msra.mxu0 %v41
    %77 = vmatprep.subr.mxu0 %v40
    %78 = vmatpush1.msra.mxu0 %v39
    %79 = vmatprep.subr.mxu0 0.0
    %80 = vmatpush2.msra.mxu0 0.0
    %81 = vmatprep.subr.mxu0 0.0
    %82 = vmatpush2.msra.mxu0 0.0
    %83 = vmatprep.subr.mxu0 0.0
    %84 = vmatpush2.msra.mxu0 0.0
    %85 = vmatprep.subr.mxu0 0.0
    %86 = vmatpush2.msra.mxu0 0.0
    %87 = vmatprep.subr.mxu0 0.0
    %88 = vmatpush2.msra.mxu0 0.0
    %89 = vmatprep.subr.mxu0 0.0
    %90 = vmatpush2.msra.mxu0 0.0
    %91 = vmatprep.subr.mxu0 0.0
    %92 = vmatpush2.msra.mxu0 0.0
    %93 = vmatprep.subr.mxu0 0.0
    %94 = vmatpush2.msra.mxu0 0.0
    %95 = vmatprep.subr.mxu0 0.0
    %96 = vmatpush2.msra.mxu0 0.0
    %97 = vmatprep.subr.mxu0 0.0
    %98 = vmatpush2.msra.mxu0 0.0
    %99 = vmatprep.subr.mxu0 0.0
    %100 = vmatpush2.msra.mxu0 0.0
    %101 = vmatprep.subr.mxu0 0.0
    %102 = vmatpush2.msra.mxu0 0.0
    %103 = vmatprep.subr.mxu0 0.0
    %104 = vmatpush2.msra.mxu0 0.0
    %105 = vmatprep.subr.mxu0 0.0
    %106 = vmatpush2.msra.mxu0 0.0
    %107 = vmatprep.subr.mxu0 0.0
    %108 = vmatpush2.msra.mxu0 0.0
    %109 = vmatprep.subr.mxu0 0.0
    %110 = vmatpush2.msra.mxu0 0.0
    %111 = vmatprep.mubr.f32.mxu0 0.0
    %112 = vmatmul.mubr.f32.gmra.mxu0 %v45
    %v113 = vpop.f32.mrf.mxu0
    %v114 = vadd.f32 0.0, %v113
    %v115 = vpop.f32.mrf.mxu0
    %v116 = vadd.f32 0.0, %v115
    %117 = vdwg.mxu0
    %v120 = vcombine.low %v114, %v116
    %v122 = vunpack.c.l.s4 1983009808
    %v123 = vunpack.c.0.s8 %v122
    %v124 = vlaneseq
    %v125 = vshrl.u32 %v124, 7
    %v126 = vsub.s32 %v123, %v125
    %v127 = vrot.slane %v120, %v126
    %129 = vst [vmem:[#allocation7] sm:$0xf] %v127
    // Predicated region
    $region18: #{tpu_custom_call.1} parent=1 // pred_check
      _
    $region19: #{tpu_custom_call.1} parent=1 // pred_check_branch
      %131 = sbr.rel (0) target = $region21
    $region20: #{tpu_custom_call.1} parent=1 // pred_region
      %s133 = ssub.s32 64, 64
      %134 = vsyncadd [#allocation4], %s133
      %s136 = sshll.u32 [#allocation7], 4
      %s137 = int_to_ptr.vmem [resolvable:$true] %s136
      %139 = dma.vmem_to_hbm [thread:$0]  %s137, 64, %s2, [#allocation4]
    $region21: #{tpu_custom_call.1} parent=1 // pred_fallthru
      _
    // Predicated region
    $region22: #{tpu_custom_call.1} parent=1 // pred_check
      _
    $region23: #{tpu_custom_call.1} parent=1 // pred_check_branch
      %141 = sbr.rel (0) target = $region25
    $region24: #{tpu_custom_call.1} parent=1 // pred_region
      %142 = dma.done [#allocation4], 64
    $region25: #{tpu_custom_call.1} parent=1 // pred_fallthru
      _
    %143 = vsyncpa [#allocation3], 1
    %144 = vsyncpa [#allocation6], 1
    %145 = vsyncpa [#allocation4], 1

</llo_original>
